<compile_context>
chip_gen: v6e
topology: v6e:2x2x1
jax: 0.10.0
libtpu: 0.0.40
codegen_flags: <defaults>
</compile_context>

<pallas_src>
import functools

import jax
import jax.numpy as jnp
from jax.experimental import pallas as pl
from jax.experimental.pallas import tpu as pltpu

PAD = 128  # lane width; every layer runs at this padded feature width.


# -----------------------------------------------------------------------------
# Fused kernel: cond_encoder1 -> (split) main -> fused (m_w3 | fc1 | fc2)
# -----------------------------------------------------------------------------
def _encoder_kernel(y_ref, c_ref, w_ref, b_ref, out_ref):
    f32 = jnp.float32

    def layer(x, wi, bi, relu):
        h = jnp.dot(x, w_ref[wi], preferred_element_type=f32) + b_ref[bi]
        return jnp.maximum(h, 0.0) if relu else h

    # cond_encoder1: Linear -> ReLU -> Linear -> ReLU -> Linear
    h = layer(c_ref[...], 0, 0, True)
    h = layer(h, 1, 1, True)
    cond1 = layer(h, 2, 2, False)

    # main[0]: Linear(input_dim + 64, 32) via split weight (no concat), + ReLU
    x = (jnp.dot(y_ref[...], w_ref[3], preferred_element_type=f32)
         + jnp.dot(cond1, w_ref[4], preferred_element_type=f32)
         + b_ref[3])
    x = jnp.maximum(x, 0.0)
    # main[2]: Linear(32, 32) + ReLU
    x = layer(x, 5, 4, True)
    # main[4] (32->16) fused with fc1|fc2 (16->z_dim each) -> (B, 2*z_dim)
    out_ref[...] = layer(x, 6, 5, False)


# -----------------------------------------------------------------------------
# Parameter container / init (deterministic, synthetic weights, PyTorch layout)
# -----------------------------------------------------------------------------
def init_params(key, input_dim, cond_dim, h_dim, z_dim):
    """Returns dict of (out, in) weights and (out,) biases, PyTorch convention."""
    shapes = {
        "ce_w1": (h_dim, cond_dim), "ce_b1": (h_dim,),
        "ce_w2": (h_dim, h_dim),    "ce_b2": (h_dim,),
        "ce_w3": (64, h_dim),       "ce_b3": (64,),
        "m_w1":  (32, input_dim + 64), "m_b1": (32,),
        "m_w2":  (32, 32),          "m_b2": (32,),
        "m_w3":  (16, 32),          "m_b3": (16,),
        "fc1_w": (z_dim, 16),       "fc1_b": (z_dim,),
        "fc2_w": (z_dim, 16),       "fc2_b": (z_dim,),
    }
    params = {}
    keys = jax.random.split(key, len(shapes))
    for (name, shp), k in zip(shapes.items(), keys):
        fan_in = shp[-1] if len(shp) == 2 else 16
        bound = 1.0 / jnp.sqrt(jnp.float32(fan_in))
        params[name] = jax.random.uniform(
            k, shp, dtype=jnp.float32, minval=-bound, maxval=bound)
    return params


# -----------------------------------------------------------------------------
# One-time parameter packing (hoisted out of the per-call path)
# -----------------------------------------------------------------------------
def pack_params(params, *, input_dim, z_dim):
    """Transpose, split, fuse and zero-pad all weights into one (7, PAD, PAD)
    weight stack plus an (8, PAD) bias stack.  Run once and cache."""
    assert input_dim <= PAD and 2 * z_dim <= PAD

    def pw(w_t):  # (in, out) -> (PAD, PAD), zero padded
        out = jnp.zeros((PAD, PAD), jnp.float32)
        return out.at[: w_t.shape[0], : w_t.shape[1]].set(w_t.astype(jnp.float32))

    def pb(b):    # (out,) -> (PAD,), zero padded
        return jnp.zeros((PAD,), jnp.float32).at[: b.shape[0]].set(
            b.astype(jnp.float32))

    m_w1 = params["m_w1"]                         # (32, input_dim + 64)
    m_wy = m_w1[:, :input_dim].T                  # (input_dim, 32)
    m_wc = m_w1[:, input_dim:].T                  # (64, 32)

    # Fold main[-1] (32->16) with fc1/fc2 (16->z_dim): no nonlinearity between.
    fc_w = jnp.concatenate([params["fc1_w"].T, params["fc2_w"].T], axis=1)  # (16, 2z)
    fused_w = params["m_w3"].T @ fc_w                                       # (32, 2z)
    fused_b = params["m_b3"] @ fc_w + jnp.concatenate(
        [params["fc1_b"], params["fc2_b"]])                                 # (2z,)

    w_stack = jnp.stack([
        pw(params["ce_w1"].T), pw(params["ce_w2"].T), pw(params["ce_w3"].T),
        pw(m_wy), pw(m_wc), pw(params["m_w2"].T), pw(fused_w),
    ])                                                                       # (7,128,128)
    zero_row = jnp.zeros((PAD,), jnp.float32)
    b_stack = jnp.stack([
        pb(params["ce_b1"]), pb(params["ce_b2"]), pb(params["ce_b3"]),
        pb(params["m_b1"]), pb(params["m_b2"]), pb(fused_b),
        zero_row, zero_row,                                                  # pad to 8 rows
    ])                                                                       # (8,128)
    return w_stack, b_stack


# -----------------------------------------------------------------------------
# Wrapper: minimal per-call glue (cond slice, input pad) + pallas_call
# -----------------------------------------------------------------------------
@functools.partial(jax.jit, static_argnames=("cond_dim", "z_dim"))
def contact_vae_encoder(y, cond, w_stack, b_stack, *, cond_dim, z_dim):
    # NOTE: p_dim of the original module is stored but unused in forward.
    B = y.shape[0]
    assert y.shape[1] <= PAD and cond_dim <= PAD

    cond1_in = cond[:, cond.shape[1] - cond_dim:]
    y_p = jnp.pad(y.astype(jnp.float32), ((0, 0), (0, PAD - y.shape[1])))
    c_p = jnp.pad(cond1_in.astype(jnp.float32), ((0, 0), (0, PAD - cond_dim)))

    # Batch tiling: split big batches across TensorCores; grid=(1,) otherwise.
    tb = 256 if (B >= 256 and B % 256 == 0) else B
    grid = (B // tb,)

    cost = pl.CostEstimate(
        flops=2 * B * 7 * PAD * PAD,
        transcendentals=0,
        bytes_accessed=4 * (w_stack.size + b_stack.size + 3 * B * PAD),
    )

    out = pl.pallas_call(
        _encoder_kernel,
        out_shape=jax.ShapeDtypeStruct((B, PAD), jnp.float32),
        grid=grid,
        in_specs=[
            pl.BlockSpec((tb, PAD), lambda i: (i, 0)),
            pl.BlockSpec((tb, PAD), lambda i: (i, 0)),
            pl.BlockSpec(w_stack.shape, lambda i: (0, 0, 0)),
            pl.BlockSpec(b_stack.shape, lambda i: (0, 0)),
        ],
        out_specs=pl.BlockSpec((tb, PAD), lambda i: (i, 0)),
        compiler_params=pltpu.CompilerParams(
            dimension_semantics=("parallel",)),
        cost_estimate=cost,
    )(y_p, c_p, w_stack, b_stack)

    return out[:, :z_dim], out[:, z_dim:2 * z_dim]


# -----------------------------------------------------------------------------
# Pure-JAX reference matching the PyTorch module exactly.
# -----------------------------------------------------------------------------
def reference(y, cond, params, *, cond_dim):
    def lin(x, w, b):
        return x @ w.T + b

    c = cond[:, cond.shape[1] - cond_dim:]
    h = jax.nn.relu(lin(c, params["ce_w1"], params["ce_b1"]))
    h = jax.nn.relu(lin(h, params["ce_w2"], params["ce_b2"]))
    cond1 = lin(h, params["ce_w3"], params["ce_b3"])
    x = jnp.concatenate([y, cond1], axis=1)
    x = jax.nn.relu(lin(x, params["m_w1"], params["m_b1"]))
    x = jax.nn.relu(lin(x, params["m_w2"], params["m_b2"]))
    x = lin(x, params["m_w3"], params["m_b3"])
    return (lin(x, params["fc1_w"], params["fc1_b"]),
            lin(x, params["fc2_w"], params["fc2_b"]))


if __name__ == "__main__":
    # Small synthetic shapes consistent with the module.
    input_dim = 16     # dim of y
    cond_dim = 24      # last cond_dim cols of cond are used
    cond_full = 32     # cond has extra leading features that get sliced off
    h_dim = 32
    z_dim = 8

    key = jax.random.PRNGKey(0)
    k_params, k_y, k_c, k_y2, k_c2 = jax.random.split(key, 5)

    params = init_params(k_params, input_dim, cond_dim, h_dim, z_dim)
    w_stack, b_stack = jax.block_until_ready(
        pack_params(params, input_dim=input_dim, z_dim=z_dim))

    # --- small batch: grid=(1,), fully resident in VMEM ---
    B = 8
    y = jax.random.normal(k_y, (B, input_dim), dtype=jnp.float32)
    cond = jax.random.normal(k_c, (B, cond_full), dtype=jnp.float32)
    mu, logvar = contact_vae_encoder(
        y, cond, w_stack, b_stack, cond_dim=cond_dim, z_dim=z_dim)
    jax.block_until_ready((mu, logvar))

    mu_ref, lv_ref = reference(y, cond, params, cond_dim=cond_dim)
    assert mu.shape == (B, z_dim) and logvar.shape == (B, z_dim)
    assert jnp.allclose(mu, mu_ref, atol=1e-4, rtol=1e-4)
    assert jnp.allclose(logvar, lv_ref, atol=1e-4, rtol=1e-4)

    # --- larger batch: exercises the parallel batch grid (both TCs on v7x) ---
    B2 = 512
    y2 = jax.random.normal(k_y2, (B2, input_dim), dtype=jnp.float32)
    cond2 = jax.random.normal(k_c2, (B2, cond_full), dtype=jnp.float32)
    mu2, lv2 = contact_vae_encoder(
        y2, cond2, w_stack, b_stack, cond_dim=cond_dim, z_dim=z_dim)
    jax.block_until_ready((mu2, lv2))

    mu2_ref, lv2_ref = reference(y2, cond2, params, cond_dim=cond_dim)
    assert jnp.allclose(mu2, mu2_ref, atol=1e-4, rtol=1e-4)
    assert jnp.allclose(lv2, lv2_ref, atol=1e-4, rtol=1e-4)

    print("KERNEL_OK")
</pallas_src>

<mosaic_0001>
module attributes {stable_mosaic.version = 11 : i64} {
  func.func @_encoder_kernel(%arg0: i32, %arg1: memref<8x128xf32, #tpu.memory_space<vmem>>, %arg2: memref<8x128xf32, #tpu.memory_space<vmem>>, %arg3: memref<7x128x128xf32, #tpu.memory_space<vmem>>, %arg4: memref<8x128xf32, #tpu.memory_space<vmem>>, %arg5: memref<8x128xf32, #tpu.memory_space<vmem>>) attributes {dimension_semantics = [#tpu.dimension_semantics<parallel>], iteration_bounds = array<i64: 1>, scalar_prefetch = 0 : i64, scratch_operands = 0 : i64, tpu.core_type = #tpu.core_type<tc>, window_params = [{transform_indices = @transform_0, window_bounds = array<i64: 8, 128>}, {transform_indices = @transform_1, window_bounds = array<i64: 8, 128>}, {pipeline_mode = #tpu.pipeline_mode<synchronous>, transform_indices = @transform_2, window_bounds = array<i64: 7, 128, 128>}, {pipeline_mode = #tpu.pipeline_mode<synchronous>, transform_indices = @transform_3, window_bounds = array<i64: 8, 128>}, {transform_indices = @transform_4, window_bounds = array<i64: 8, 128>}]} {
    %c0 = arith.constant 0 : index
    %c0_0 = arith.constant 0 : index
    %0 = vector.load %arg2[%c0, %c0_0] : memref<8x128xf32, #tpu.memory_space<vmem>>, vector<8x128xf32>
    %c0_1 = arith.constant 0 : index
    %c0_2 = arith.constant 0 : index
    %c0_3 = arith.constant 0 : index
    %1 = vector.load %arg3[%c0_1, %c0_2, %c0_3] : memref<7x128x128xf32, #tpu.memory_space<vmem>>, vector<1x128x128xf32>
    %2 = vector.shape_cast %1 : vector<1x128x128xf32> to vector<128x128xf32>
    %cst = arith.constant dense<0.000000e+00> : vector<8x128xf32>
    %3 = tpu.matmul %0, %2, %cst {dimension_numbers = #tpu.dot_dimension_numbers<[1], [0], [0], [1], [0, 0, 1, 1], [], []>} : vector<8x128xf32>, vector<128x128xf32>, vector<8x128xf32> -> vector<8x128xf32>
    %c0_4 = arith.constant 0 : index
    %c0_5 = arith.constant 0 : index
    %4 = vector.load %arg4[%c0_4, %c0_5] : memref<8x128xf32, #tpu.memory_space<vmem>>, vector<1x128xf32>
    %5 = vector.shape_cast %4 : vector<1x128xf32> to vector<128xf32>
    %6 = vector.shape_cast %5 : vector<128xf32> to vector<1x128xf32>
    %7 = vector.broadcast %6 : vector<1x128xf32> to vector<8x128xf32>
    %8 = arith.addf %3, %7 : vector<8x128xf32>
    %cst_6 = arith.constant 0.000000e+00 : f32
    %9 = vector.broadcast %cst_6 : f32 to vector<8x128xf32>
    %10 = arith.maximumf %8, %9 : vector<8x128xf32>
    %c1 = arith.constant 1 : index
    %c0_7 = arith.constant 0 : index
    %c0_8 = arith.constant 0 : index
    %11 = vector.load %arg3[%c1, %c0_7, %c0_8] : memref<7x128x128xf32, #tpu.memory_space<vmem>>, vector<1x128x128xf32>
    %12 = vector.shape_cast %11 : vector<1x128x128xf32> to vector<128x128xf32>
    %cst_9 = arith.constant dense<0.000000e+00> : vector<8x128xf32>
    %13 = tpu.matmul %10, %12, %cst_9 {dimension_numbers = #tpu.dot_dimension_numbers<[1], [0], [0], [1], [0, 0, 1, 1], [], []>} : vector<8x128xf32>, vector<128x128xf32>, vector<8x128xf32> -> vector<8x128xf32>
    %c1_10 = arith.constant 1 : index
    %c0_11 = arith.constant 0 : index
    %14 = vector.load %arg4[%c1_10, %c0_11] : memref<8x128xf32, #tpu.memory_space<vmem>>, vector<1x128xf32>
    %15 = vector.shape_cast %14 : vector<1x128xf32> to vector<128xf32>
    %16 = vector.shape_cast %15 : vector<128xf32> to vector<1x128xf32>
    %17 = vector.broadcast %16 : vector<1x128xf32> to vector<8x128xf32>
    %18 = arith.addf %13, %17 : vector<8x128xf32>
    %cst_12 = arith.constant 0.000000e+00 : f32
    %19 = vector.broadcast %cst_12 : f32 to vector<8x128xf32>
    %20 = arith.maximumf %18, %19 : vector<8x128xf32>
    %c2 = arith.constant 2 : index
    %c0_13 = arith.constant 0 : index
    %c0_14 = arith.constant 0 : index
    %21 = vector.load %arg3[%c2, %c0_13, %c0_14] : memref<7x128x128xf32, #tpu.memory_space<vmem>>, vector<1x128x128xf32>
    %22 = vector.shape_cast %21 : vector<1x128x128xf32> to vector<128x128xf32>
    %cst_15 = arith.constant dense<0.000000e+00> : vector<8x128xf32>
    %23 = tpu.matmul %20, %22, %cst_15 {dimension_numbers = #tpu.dot_dimension_numbers<[1], [0], [0], [1], [0, 0, 1, 1], [], []>} : vector<8x128xf32>, vector<128x128xf32>, vector<8x128xf32> -> vector<8x128xf32>
    %c2_16 = arith.constant 2 : index
    %c0_17 = arith.constant 0 : index
    %24 = vector.load %arg4[%c2_16, %c0_17] : memref<8x128xf32, #tpu.memory_space<vmem>>, vector<1x128xf32>
    %25 = vector.shape_cast %24 : vector<1x128xf32> to vector<128xf32>
    %26 = vector.shape_cast %25 : vector<128xf32> to vector<1x128xf32>
    %27 = vector.broadcast %26 : vector<1x128xf32> to vector<8x128xf32>
    %28 = arith.addf %23, %27 : vector<8x128xf32>
    %c0_18 = arith.constant 0 : index
    %c0_19 = arith.constant 0 : index
    %29 = vector.load %arg1[%c0_18, %c0_19] : memref<8x128xf32, #tpu.memory_space<vmem>>, vector<8x128xf32>
    %c3 = arith.constant 3 : index
    %c0_20 = arith.constant 0 : index
    %c0_21 = arith.constant 0 : index
    %30 = vector.load %arg3[%c3, %c0_20, %c0_21] : memref<7x128x128xf32, #tpu.memory_space<vmem>>, vector<1x128x128xf32>
    %31 = vector.shape_cast %30 : vector<1x128x128xf32> to vector<128x128xf32>
    %cst_22 = arith.constant dense<0.000000e+00> : vector<8x128xf32>
    %32 = tpu.matmul %29, %31, %cst_22 {dimension_numbers = #tpu.dot_dimension_numbers<[1], [0], [0], [1], [0, 0, 1, 1], [], []>} : vector<8x128xf32>, vector<128x128xf32>, vector<8x128xf32> -> vector<8x128xf32>
    %c4 = arith.constant 4 : index
    %c0_23 = arith.constant 0 : index
    %c0_24 = arith.constant 0 : index
    %33 = vector.load %arg3[%c4, %c0_23, %c0_24] : memref<7x128x128xf32, #tpu.memory_space<vmem>>, vector<1x128x128xf32>
    %34 = vector.shape_cast %33 : vector<1x128x128xf32> to vector<128x128xf32>
    %cst_25 = arith.constant dense<0.000000e+00> : vector<8x128xf32>
    %35 = tpu.matmul %28, %34, %cst_25 {dimension_numbers = #tpu.dot_dimension_numbers<[1], [0], [0], [1], [0, 0, 1, 1], [], []>} : vector<8x128xf32>, vector<128x128xf32>, vector<8x128xf32> -> vector<8x128xf32>
    %36 = arith.addf %32, %35 : vector<8x128xf32>
    %c3_26 = arith.constant 3 : index
    %c0_27 = arith.constant 0 : index
    %37 = vector.load %arg4[%c3_26, %c0_27] : memref<8x128xf32, #tpu.memory_space<vmem>>, vector<1x128xf32>
    %38 = vector.shape_cast %37 : vector<1x128xf32> to vector<128xf32>
    %39 = vector.shape_cast %38 : vector<128xf32> to vector<1x128xf32>
    %40 = vector.broadcast %39 : vector<1x128xf32> to vector<8x128xf32>
    %41 = arith.addf %36, %40 : vector<8x128xf32>
    %cst_28 = arith.constant 0.000000e+00 : f32
    %42 = vector.broadcast %cst_28 : f32 to vector<8x128xf32>
    %43 = arith.maximumf %41, %42 : vector<8x128xf32>
    %c5 = arith.constant 5 : index
    %c0_29 = arith.constant 0 : index
    %c0_30 = arith.constant 0 : index
    %44 = vector.load %arg3[%c5, %c0_29, %c0_30] : memref<7x128x128xf32, #tpu.memory_space<vmem>>, vector<1x128x128xf32>
    %45 = vector.shape_cast %44 : vector<1x128x128xf32> to vector<128x128xf32>
    %cst_31 = arith.constant dense<0.000000e+00> : vector<8x128xf32>
    %46 = tpu.matmul %43, %45, %cst_31 {dimension_numbers = #tpu.dot_dimension_numbers<[1], [0], [0], [1], [0, 0, 1, 1], [], []>} : vector<8x128xf32>, vector<128x128xf32>, vector<8x128xf32> -> vector<8x128xf32>
    %c4_32 = arith.constant 4 : index
    %c0_33 = arith.constant 0 : index
    %47 = vector.load %arg4[%c4_32, %c0_33] : memref<8x128xf32, #tpu.memory_space<vmem>>, vector<1x128xf32>
    %48 = vector.shape_cast %47 : vector<1x128xf32> to vector<128xf32>
    %49 = vector.shape_cast %48 : vector<128xf32> to vector<1x128xf32>
    %50 = vector.broadcast %49 : vector<1x128xf32> to vector<8x128xf32>
    %51 = arith.addf %46, %50 : vector<8x128xf32>
    %cst_34 = arith.constant 0.000000e+00 : f32
    %52 = vector.broadcast %cst_34 : f32 to vector<8x128xf32>
    %53 = arith.maximumf %51, %52 : vector<8x128xf32>
    %c6 = arith.constant 6 : index
    %c0_35 = arith.constant 0 : index
    %c0_36 = arith.constant 0 : index
    %54 = vector.load %arg3[%c6, %c0_35, %c0_36] : memref<7x128x128xf32, #tpu.memory_space<vmem>>, vector<1x128x128xf32>
    %55 = vector.shape_cast %54 : vector<1x128x128xf32> to vector<128x128xf32>
    %cst_37 = arith.constant dense<0.000000e+00> : vector<8x128xf32>
    %56 = tpu.matmul %53, %55, %cst_37 {dimension_numbers = #tpu.dot_dimension_numbers<[1], [0], [0], [1], [0, 0, 1, 1], [], []>} : vector<8x128xf32>, vector<128x128xf32>, vector<8x128xf32> -> vector<8x128xf32>
    %c5_38 = arith.constant 5 : index
    %c0_39 = arith.constant 0 : index
    %57 = vector.load %arg4[%c5_38, %c0_39] : memref<8x128xf32, #tpu.memory_space<vmem>>, vector<1x128xf32>
    %58 = vector.shape_cast %57 : vector<1x128xf32> to vector<128xf32>
    %59 = vector.shape_cast %58 : vector<128xf32> to vector<1x128xf32>
    %60 = vector.broadcast %59 : vector<1x128xf32> to vector<8x128xf32>
    %61 = arith.addf %56, %60 : vector<8x128xf32>
    %c0_40 = arith.constant 0 : index
    %c0_41 = arith.constant 0 : index
    %62 = vector.load %arg5[%c0_40, %c0_41] : memref<8x128xf32, #tpu.memory_space<vmem>>, vector<8x128xf32>
    tpu.vector_store %arg5[%c0_40, %c0_41], %61 {strides = array<i32>} : memref<8x128xf32, #tpu.memory_space<vmem>>, vector<8x128xf32>,
    return
  }
  func.func @transform_0(%arg0: i32) -> (i32, i32) {
    %c0_i32 = arith.constant 0 : i32
    %c0_i32_0 = arith.constant 0 : i32
    return %arg0, %c0_i32 : i32, i32
  }
  func.func @transform_1(%arg0: i32) -> (i32, i32) {
    %c0_i32 = arith.constant 0 : i32
    %c0_i32_0 = arith.constant 0 : i32
    return %arg0, %c0_i32 : i32, i32
  }
  func.func @transform_2(%arg0: i32) -> (i32, i32, i32) {
    %c0_i32 = arith.constant 0 : i32
    %c0_i32_0 = arith.constant 0 : i32
    %c0_i32_1 = arith.constant 0 : i32
    %c0_i32_2 = arith.constant 0 : i32
    return %c0_i32, %c0_i32_0, %c0_i32_1 : i32, i32, i32
  }
  func.func @transform_3(%arg0: i32) -> (i32, i32) {
    %c0_i32 = arith.constant 0 : i32
    %c0_i32_0 = arith.constant 0 : i32
    %c0_i32_1 = arith.constant 0 : i32
    return %c0_i32, %c0_i32_0 : i32, i32
  }
  func.func @transform_4(%arg0: i32) -> (i32, i32) {
    %c0_i32 = arith.constant 0 : i32
    %c0_i32_0 = arith.constant 0 : i32
    return %arg0, %c0_i32 : i32, i32
  }
}

</mosaic_0001>

<llo_original>
// kernel: contact_vae_encoder.1
$region0: #{contact_vae_encoder.1}
  #allocation0 [shape = 'u32[]', space=smem, size = 0x4, offset = 0x4, fixed_abs, tag = 'smem constant byte address 0x4 - core index']
  #allocation1 [shape = 'u32[144,128]{1,0:T(1,128)}', space=vmem, size = 0x12000, scoped, tag = 'internal scratch']
  %s0 = inlined_call_operand.vmem [shape: f32[8,128], index: 0, kind: input, shape index: {}]
  %s1 = inlined_call_operand.vmem [shape: f32[8,128], index: 1, kind: input, shape index: {}]
  %s2 = inlined_call_operand.hbm [shape: f32[7,128,128], index: 2, kind: input, shape index: {}]
  %s3 = inlined_call_operand.vmem [shape: f32[8,128], index: 3, kind: input, shape index: {}]
  %s4 = inlined_call_operand.vmem [shape: f32[8,128], index: 4, kind: output, shape index: {}]
  %s5 = sld [smem:[#allocation0]]
  $region30: #{contact_vae_encoder.1} parent=0
    _
  %s7 = ssub.s32 1, %s5
  %s8 = scalar_select 0, %s7, %s5
  $region1: #{contact_vae_encoder.1} parent=0
    #allocation2 [shape = 'u8[458752]{0}', space=vmem, size = 0x70000, scoped, tag = 'input window, operand 2, single buffered']
    #allocation3 [shape = 's32[1]{0}', space=sflag, size = 0x4, scoped, tag = 'scoped memory for contact_vae_encoder.1']
    %9 = vsyncpa [#allocation3], 0
    // Predicated region
    $region2: #{contact_vae_encoder.1} parent=1 // pred_check
      _
    $region3: #{contact_vae_encoder.1} parent=1 // pred_check_branch
      %11 = sbr.rel (0) target = $region5
    $region4: #{contact_vae_encoder.1} parent=1 // pred_region
      _
    $region5: #{contact_vae_encoder.1} parent=1 // pred_fallthru
      _
    // Predicated region
    $region6: #{contact_vae_encoder.1} parent=1 // pred_check
      _
    $region7: #{contact_vae_encoder.1} parent=1 // pred_check_branch
      %13 = sbr.rel (0) target = $region9
    $region8: #{contact_vae_encoder.1} parent=1 // pred_region
      _
    $region9: #{contact_vae_encoder.1} parent=1 // pred_fallthru
      _
    // Predicated region
    $region10: #{contact_vae_encoder.1} parent=1 // pred_check
      _
    $region11: #{contact_vae_encoder.1} parent=1 // pred_check_branch
      %15 = sbr.rel (0) target = $region13
    $region12: #{contact_vae_encoder.1} parent=1 // pred_region
      %s17 = ssub.s32 14336, 14336
      %18 = vsyncadd [#allocation3], %s17
      %s19 = sshll.u32 [#allocation2], 4
      %s20 = int_to_ptr.vmem [resolvable:$true] %s19
      %25 = dma.hbm_to_vmem [thread:$0]  %s2, 14336, %s20, [#allocation3], 128, 128, 8
    $region13: #{contact_vae_encoder.1} parent=1 // pred_fallthru
      _
    // Predicated region
    $region14: #{contact_vae_encoder.1} parent=1 // pred_check
      _
    $region15: #{contact_vae_encoder.1} parent=1 // pred_check_branch
      %27 = sbr.rel (0) target = $region17
    $region16: #{contact_vae_encoder.1} parent=1 // pred_region
      _
    $region17: #{contact_vae_encoder.1} parent=1 // pred_fallthru
      _
    // Predicated region
    $region18: #{contact_vae_encoder.1} parent=1 // pred_check
      _
    $region19: #{contact_vae_encoder.1} parent=1 // pred_check_branch
      %29 = sbr.rel (0) target = $region21
    $region20: #{contact_vae_encoder.1} parent=1 // pred_region
      %30 = dma.done [#allocation3], 14336
    $region21: #{contact_vae_encoder.1} parent=1 // pred_fallthru
      _
    %v31 = vld [vmem:[%s1] sm:$0xff]
    %v32 = vld [vmem:[#allocation2] sm:$0xff]
    %v33 = vld [vmem:[#allocation2 + $0x8] sm:$0xff]
    %v34 = vld [vmem:[#allocation2 + $0x10] sm:$0xff]
    %v35 = vld [vmem:[#allocation2 + $0x18] sm:$0xff]
    %v36 = vld [vmem:[#allocation2 + $0x20] sm:$0xff]
    %v37 = vld [vmem:[#allocation2 + $0x28] sm:$0xff]
    %v38 = vld [vmem:[#allocation2 + $0x30] sm:$0xff]
    %v39 = vld [vmem:[#allocation2 + $0x38] sm:$0xff]
    %v40 = vld [vmem:[#allocation2 + $0x40] sm:$0xff]
    %v41 = vld [vmem:[#allocation2 + $0x48] sm:$0xff]
    %v42 = vld [vmem:[#allocation2 + $0x50] sm:$0xff]
    %v43 = vld [vmem:[#allocation2 + $0x58] sm:$0xff]
    %v44 = vld [vmem:[#allocation2 + $0x60] sm:$0xff]
    %v45 = vld [vmem:[#allocation2 + $0x68] sm:$0xff]
    %v46 = vld [vmem:[#allocation2 + $0x70] sm:$0xff]
    %v47 = vld [vmem:[#allocation2 + $0x78] sm:$0xff]
    %v48 = vld [vmem:[%s3] sm:$0x1]
    %v49 = vlaneseq
    %v50 = vshrl.u32 %v49, 7
    %v51 = vsub.s32 0, %v50
    %v52 = vrot.slane %v48, %v51
    %53 = vmatprep.subr.mxu0 0.0
    %54 = vmatpush1.msra.mxu0 %v47
    %55 = vmatprep.subr.mxu0 0.0
    %56 = vmatpush1.msra.mxu0 %v46
    %57 = vmatprep.subr.mxu0 0.0
    %58 = vmatpush1.msra.mxu0 %v45
    %59 = vmatprep.subr.mxu0 0.0
    %60 = vmatpush1.msra.mxu0 %v44
    %61 = vmatprep.subr.mxu0 0.0
    %62 = vmatpush1.msra.mxu0 %v43
    %63 = vmatprep.subr.mxu0 0.0
    %64 = vmatpush1.msra.mxu0 %v42
    %65 = vmatprep.subr.mxu0 0.0
    %66 = vmatpush1.msra.mxu0 %v41
    %67 = vmatprep.subr.mxu0 0.0
    %68 = vmatpush1.msra.mxu0 %v40
    %69 = vmatprep.subr.mxu0 0.0
    %70 = vmatpush1.msra.mxu0 %v39
    %71 = vmatprep.subr.mxu0 0.0
    %72 = vmatpush1.msra.mxu0 %v38
    %73 = vmatprep.subr.mxu0 0.0
    %74 = vmatpush1.msra.mxu0 %v37
    %75 = vmatprep.subr.mxu0 0.0
    %76 = vmatpush1.msra.mxu0 %v36
    %77 = vmatprep.subr.mxu0 0.0
    %78 = vmatpush1.msra.mxu0 %v35
    %79 = vmatprep.subr.mxu0 0.0
    %80 = vmatpush1.msra.mxu0 %v34
    %81 = vmatprep.subr.mxu0 0.0
    %82 = vmatpush1.msra.mxu0 %v33
    %83 = vmatprep.subr.mxu0 0.0
    %84 = vmatpush1.msra.mxu0 %v32
    %85 = vmatprep.subr.mxu0 0.0
    %86 = vmatpush2.msra.mxu0 0.0
    %87 = vmatprep.subr.mxu0 0.0
    %88 = vmatpush2.msra.mxu0 0.0
    %89 = vmatprep.subr.mxu0 0.0
    %90 = vmatpush2.msra.mxu0 0.0
    %91 = vmatprep.subr.mxu0 0.0
    %92 = vmatpush2.msra.mxu0 0.0
    %93 = vmatprep.subr.mxu0 0.0
    %94 = vmatpush2.msra.mxu0 0.0
    %95 = vmatprep.subr.mxu0 0.0
    %96 = vmatpush2.msra.mxu0 0.0
    %97 = vmatprep.subr.mxu0 0.0
    %98 = vmatpush2.msra.mxu0 0.0
    %99 = vmatprep.subr.mxu0 0.0
    %100 = vmatpush2.msra.mxu0 0.0
    %101 = vmatprep.subr.mxu0 0.0
    %102 = vmatpush2.msra.mxu0 0.0
    %103 = vmatprep.subr.mxu0 0.0
    %104 = vmatpush2.msra.mxu0 0.0
    %105 = vmatprep.subr.mxu0 0.0
    %106 = vmatpush2.msra.mxu0 0.0
    %107 = vmatprep.subr.mxu0 0.0
    %108 = vmatpush2.msra.mxu0 0.0
    %109 = vmatprep.subr.mxu0 0.0
    %110 = vmatpush2.msra.mxu0 0.0
    %111 = vmatprep.subr.mxu0 0.0
    %112 = vmatpush2.msra.mxu0 0.0
    %113 = vmatprep.subr.mxu0 0.0
    %114 = vmatpush2.msra.mxu0 0.0
    %115 = vmatprep.subr.mxu0 0.0
    %116 = vmatpush2.msra.mxu0 0.0
    %117 = vmatprep.mubr.f32.mxu0 0.0
    %118 = vmatmul.mubr.f32.gmra.mxu0 %v31
    %v119 = vpop.f32.mrf.mxu0
    %v120 = vadd.f32 %v52, %v119
    %v121 = vpop.f32.mrf.mxu0
    %122 = vdwg.mxu0
    %v123 = vmax.f32 %v120, 0.0
    %s124 = scalar_lea.vmem [#allocation2], 128
    %v125 = vld [vmem:[%s124] sm:$0xff]
    %v126 = vld [vmem:[%s124 + $0x8] sm:$0xff]
    %v127 = vld [vmem:[%s124 + $0x10] sm:$0xff]
    %v128 = vld [vmem:[%s124 + $0x18] sm:$0xff]
    %v129 = vld [vmem:[%s124 + $0x20] sm:$0xff]
    %v130 = vld [vmem:[%s124 + $0x28] sm:$0xff]
    %v131 = vld [vmem:[%s124 + $0x30] sm:$0xff]
    %v132 = vld [vmem:[%s124 + $0x38] sm:$0xff]
    %v133 = vld [vmem:[%s124 + $0x40] sm:$0xff]
    %v134 = vld [vmem:[%s124 + $0x48] sm:$0xff]
    %v135 = vld [vmem:[%s124 + $0x50] sm:$0xff]
    %v136 = vld [vmem:[%s124 + $0x58] sm:$0xff]
    %v137 = vld [vmem:[%s124 + $0x60] sm:$0xff]
    %v138 = vld [vmem:[%s124 + $0x68] sm:$0xff]
    %v139 = vld [vmem:[%s124 + $0x70] sm:$0xff]
    %v140 = vld [vmem:[%s124 + $0x78] sm:$0xff]
    %v141 = vld [vmem:[%s3 + $0x1] sm:$0x1]
    %v142 = vlaneseq
    %v143 = vshrl.u32 %v142, 7
    %v144 = vsub.s32 0, %v143
    %v145 = vrot.slane %v141, %v144
    %146 = vmatprep.subr.mxu0 0.0
    %147 = vmatpush1.msra.mxu0 %v140
    %148 = vmatprep.subr.mxu0 0.0
    %149 = vmatpush1.msra.mxu0 %v139
    %150 = vmatprep.subr.mxu0 0.0
    %151 = vmatpush1.msra.mxu0 %v138
    %152 = vmatprep.subr.mxu0 0.0
    %153 = vmatpush1.msra.mxu0 %v137
    %154 = vmatprep.subr.mxu0 0.0
    %155 = vmatpush1.msra.mxu0 %v136
    %156 = vmatprep.subr.mxu0 0.0
    %157 = vmatpush1.msra.mxu0 %v135
    %158 = vmatprep.subr.mxu0 0.0
    %159 = vmatpush1.msra.mxu0 %v134
    %160 = vmatprep.subr.mxu0 0.0
    %161 = vmatpush1.msra.mxu0 %v133
    %162 = vmatprep.subr.mxu0 0.0
    %163 = vmatpush1.msra.mxu0 %v132
    %164 = vmatprep.subr.mxu0 0.0
    %165 = vmatpush1.msra.mxu0 %v131
    %166 = vmatprep.subr.mxu0 0.0
    %167 = vmatpush1.msra.mxu0 %v130
    %168 = vmatprep.subr.mxu0 0.0
    %169 = vmatpush1.msra.mxu0 %v129
    %170 = vmatprep.subr.mxu0 0.0
    %171 = vmatpush1.msra.mxu0 %v128
    %172 = vmatprep.subr.mxu0 0.0
    %173 = vmatpush1.msra.mxu0 %v127
    %174 = vmatprep.subr.mxu0 0.0
    %175 = vmatpush1.msra.mxu0 %v126
    %176 = vmatprep.subr.mxu0 0.0
    %177 = vmatpush1.msra.mxu0 %v125
    %178 = vmatprep.subr.mxu0 0.0
    %179 = vmatpush2.msra.mxu0 0.0
    %180 = vmatprep.subr.mxu0 0.0
    %181 = vmatpush2.msra.mxu0 0.0
    %182 = vmatprep.subr.mxu0 0.0
    %183 = vmatpush2.msra.mxu0 0.0
    %184 = vmatprep.subr.mxu0 0.0
    %185 = vmatpush2.msra.mxu0 0.0
    %186 = vmatprep.subr.mxu0 0.0
    %187 = vmatpush2.msra.mxu0 0.0
    %188 = vmatprep.subr.mxu0 0.0
    %189 = vmatpush2.msra.mxu0 0.0
    %190 = vmatprep.subr.mxu0 0.0
    %191 = vmatpush2.msra.mxu0 0.0
    %192 = vmatprep.subr.mxu0 0.0
    %193 = vmatpush2.msra.mxu0 0.0
    %194 = vmatprep.subr.mxu0 0.0
    %195 = vmatpush2.msra.mxu0 0.0
    %196 = vmatprep.subr.mxu0 0.0
    %197 = vmatpush2.msra.mxu0 0.0
    %198 = vmatprep.subr.mxu0 0.0
    %199 = vmatpush2.msra.mxu0 0.0
    %200 = vmatprep.subr.mxu0 0.0
    %201 = vmatpush2.msra.mxu0 0.0
    %202 = vmatprep.subr.mxu0 0.0
    %203 = vmatpush2.msra.mxu0 0.0
    %204 = vmatprep.subr.mxu0 0.0
    %205 = vmatpush2.msra.mxu0 0.0
    %206 = vmatprep.subr.mxu0 0.0
    %207 = vmatpush2.msra.mxu0 0.0
    %208 = vmatprep.subr.mxu0 0.0
    %209 = vmatpush2.msra.mxu0 0.0
    %210 = vmatprep.mubr.f32.mxu0 0.0
    %211 = vmatmul.mubr.f32.gmra.mxu0 %v123
    %v212 = vpop.f32.mrf.mxu0
    %v213 = vadd.f32 %v145, %v212
    %v214 = vpop.f32.mrf.mxu0
    %215 = vdwg.mxu0
    %v216 = vmax.f32 %v213, 0.0
    %s217 = scalar_lea.vmem [#allocation2], 256
    %v218 = vld [vmem:[%s217] sm:$0xff]
    %v219 = vld [vmem:[%s217 + $0x8] sm:$0xff]
    %v220 = vld [vmem:[%s217 + $0x10] sm:$0xff]
    %v221 = vld [vmem:[%s217 + $0x18] sm:$0xff]
    %v222 = vld [vmem:[%s217 + $0x20] sm:$0xff]
    %v223 = vld [vmem:[%s217 + $0x28] sm:$0xff]
    %v224 = vld [vmem:[%s217 + $0x30] sm:$0xff]
    %v225 = vld [vmem:[%s217 + $0x38] sm:$0xff]
    %v226 = vld [vmem:[%s217 + $0x40] sm:$0xff]
    %v227 = vld [vmem:[%s217 + $0x48] sm:$0xff]
    %v228 = vld [vmem:[%s217 + $0x50] sm:$0xff]
    %v229 = vld [vmem:[%s217 + $0x58] sm:$0xff]
    %v230 = vld [vmem:[%s217 + $0x60] sm:$0xff]
    %v231 = vld [vmem:[%s217 + $0x68] sm:$0xff]
    %v232 = vld [vmem:[%s217 + $0x70] sm:$0xff]
    %v233 = vld [vmem:[%s217 + $0x78] sm:$0xff]
    %v234 = vld [vmem:[%s3 + $0x2] sm:$0x1]
    %v235 = vlaneseq
    %v236 = vshrl.u32 %v235, 7
    %v237 = vsub.s32 0, %v236
    %v238 = vrot.slane %v234, %v237
    %239 = vmatprep.subr.mxu0 0.0
    %240 = vmatpush1.msra.mxu0 %v233
    %241 = vmatprep.subr.mxu0 0.0
    %242 = vmatpush1.msra.mxu0 %v232
    %243 = vmatprep.subr.mxu0 0.0
    %244 = vmatpush1.msra.mxu0 %v231
    %245 = vmatprep.subr.mxu0 0.0
    %246 = vmatpush1.msra.mxu0 %v230
    %247 = vmatprep.subr.mxu0 0.0
    %248 = vmatpush1.msra.mxu0 %v229
    %249 = vmatprep.subr.mxu0 0.0
    %250 = vmatpush1.msra.mxu0 %v228
    %251 = vmatprep.subr.mxu0 0.0
    %252 = vmatpush1.msra.mxu0 %v227
    %253 = vmatprep.subr.mxu0 0.0
    %254 = vmatpush1.msra.mxu0 %v226
    %255 = vmatprep.subr.mxu0 0.0
    %256 = vmatpush1.msra.mxu0 %v225
    %257 = vmatprep.subr.mxu0 0.0
    %258 = vmatpush1.msra.mxu0 %v224
    %259 = vmatprep.subr.mxu0 0.0
    %260 = vmatpush1.msra.mxu0 %v223
    %261 = vmatprep.subr.mxu0 0.0
    %262 = vmatpush1.msra.mxu0 %v222
    %263 = vmatprep.subr.mxu0 0.0
    %264 = vmatpush1.msra.mxu0 %v221
    %265 = vmatprep.subr.mxu0 0.0
    %266 = vmatpush1.msra.mxu0 %v220
    %267 = vmatprep.subr.mxu0 0.0
    %268 = vmatpush1.msra.mxu0 %v219
    %269 = vmatprep.subr.mxu0 0.0
    %270 = vmatpush1.msra.mxu0 %v218
    %271 = vmatprep.subr.mxu0 0.0
    %272 = vmatpush2.msra.mxu0 0.0
    %273 = vmatprep.subr.mxu0 0.0
    %274 = vmatpush2.msra.mxu0 0.0
    %275 = vmatprep.subr.mxu0 0.0
    %276 = vmatpush2.msra.mxu0 0.0
    %277 = vmatprep.subr.mxu0 0.0
    %278 = vmatpush2.msra.mxu0 0.0
    %279 = vmatprep.subr.mxu0 0.0
    %280 = vmatpush2.msra.mxu0 0.0
    %281 = vmatprep.subr.mxu0 0.0
    %282 = vmatpush2.msra.mxu0 0.0
    %283 = vmatprep.subr.mxu0 0.0
    %284 = vmatpush2.msra.mxu0 0.0
    %285 = vmatprep.subr.mxu0 0.0
    %286 = vmatpush2.msra.mxu0 0.0
    %287 = vmatprep.subr.mxu0 0.0
    %288 = vmatpush2.msra.mxu0 0.0
    %289 = vmatprep.subr.mxu0 0.0
    %290 = vmatpush2.msra.mxu0 0.0
    %291 = vmatprep.subr.mxu0 0.0
    %292 = vmatpush2.msra.mxu0 0.0
    %293 = vmatprep.subr.mxu0 0.0
    %294 = vmatpush2.msra.mxu0 0.0
    %295 = vmatprep.subr.mxu0 0.0
    %296 = vmatpush2.msra.mxu0 0.0
    %297 = vmatprep.subr.mxu0 0.0
    %298 = vmatpush2.msra.mxu0 0.0
    %299 = vmatprep.subr.mxu0 0.0
    %300 = vmatpush2.msra.mxu0 0.0
    %301 = vmatprep.subr.mxu0 0.0
    %302 = vmatpush2.msra.mxu0 0.0
    %303 = vmatprep.mubr.f32.mxu0 0.0
    %304 = vmatmul.mubr.f32.gmra.mxu0 %v216
    %v305 = vpop.f32.mrf.mxu0
    %v306 = vadd.f32 %v238, %v305
    %v307 = vpop.f32.mrf.mxu0
    %308 = vdwg.mxu0
    %v309 = vld [vmem:[%s0] sm:$0xff]
    %s310 = scalar_lea.vmem [#allocation2], 384
    %v311 = vld [vmem:[%s310] sm:$0xff]
    %v312 = vld [vmem:[%s310 + $0x8] sm:$0xff]
    %v313 = vld [vmem:[%s310 + $0x10] sm:$0xff]
    %v314 = vld [vmem:[%s310 + $0x18] sm:$0xff]
    %v315 = vld [vmem:[%s310 + $0x20] sm:$0xff]
    %v316 = vld [vmem:[%s310 + $0x28] sm:$0xff]
    %v317 = vld [vmem:[%s310 + $0x30] sm:$0xff]
    %v318 = vld [vmem:[%s310 + $0x38] sm:$0xff]
    %v319 = vld [vmem:[%s310 + $0x40] sm:$0xff]
    %v320 = vld [vmem:[%s310 + $0x48] sm:$0xff]
    %v321 = vld [vmem:[%s310 + $0x50] sm:$0xff]
    %v322 = vld [vmem:[%s310 + $0x58] sm:$0xff]
    %v323 = vld [vmem:[%s310 + $0x60] sm:$0xff]
    %v324 = vld [vmem:[%s310 + $0x68] sm:$0xff]
    %v325 = vld [vmem:[%s310 + $0x70] sm:$0xff]
    %v326 = vld [vmem:[%s310 + $0x78] sm:$0xff]
    %s327 = scalar_lea.vmem [#allocation2], 512
    %v328 = vld [vmem:[%s327] sm:$0xff]
    %v329 = vld [vmem:[%s327 + $0x8] sm:$0xff]
    %v330 = vld [vmem:[%s327 + $0x10] sm:$0xff]
    %v331 = vld [vmem:[%s327 + $0x18] sm:$0xff]
    %v332 = vld [vmem:[%s327 + $0x20] sm:$0xff]
    %v333 = vld [vmem:[%s327 + $0x28] sm:$0xff]
    %v334 = vld [vmem:[%s327 + $0x30] sm:$0xff]
    %v335 = vld [vmem:[%s327 + $0x38] sm:$0xff]
    %v336 = vld [vmem:[%s327 + $0x40] sm:$0xff]
    %v337 = vld [vmem:[%s327 + $0x48] sm:$0xff]
    %v338 = vld [vmem:[%s327 + $0x50] sm:$0xff]
    %v339 = vld [vmem:[%s327 + $0x58] sm:$0xff]
    %v340 = vld [vmem:[%s327 + $0x60] sm:$0xff]
    %v341 = vld [vmem:[%s327 + $0x68] sm:$0xff]
    %v342 = vld [vmem:[%s327 + $0x70] sm:$0xff]
    %v343 = vld [vmem:[%s327 + $0x78] sm:$0xff]
    %344 = vmatprep.subr.mxu0 0.0
    %345 = vmatpush1.msra.mxu0 %v343
    %346 = vmatprep.subr.mxu0 0.0
    %347 = vmatpush1.msra.mxu0 %v342
    %348 = vmatprep.subr.mxu0 0.0
    %349 = vmatpush1.msra.mxu0 %v341
    %350 = vmatprep.subr.mxu0 0.0
    %351 = vmatpush1.msra.mxu0 %v340
    %352 = vmatprep.subr.mxu0 0.0
    %353 = vmatpush1.msra.mxu0 %v339
    %354 = vmatprep.subr.mxu0 0.0
    %355 = vmatpush1.msra.mxu0 %v338
    %356 = vmatprep.subr.mxu0 0.0
    %357 = vmatpush1.msra.mxu0 %v337
    %358 = vmatprep.subr.mxu0 0.0
    %359 = vmatpush1.msra.mxu0 %v336
    %360 = vmatprep.subr.mxu0 0.0
    %361 = vmatpush1.msra.mxu0 %v335
    %362 = vmatprep.subr.mxu0 0.0
    %363 = vmatpush1.msra.mxu0 %v334
    %364 = vmatprep.subr.mxu0 0.0
    %365 = vmatpush1.msra.mxu0 %v333
    %366 = vmatprep.subr.mxu0 0.0
    %367 = vmatpush1.msra.mxu0 %v332
    %368 = vmatprep.subr.mxu0 0.0
    %369 = vmatpush1.msra.mxu0 %v331
    %370 = vmatprep.subr.mxu0 0.0
    %371 = vmatpush1.msra.mxu0 %v330
    %372 = vmatprep.subr.mxu0 0.0
    %373 = vmatpush1.msra.mxu0 %v329
    %374 = vmatprep.subr.mxu0 0.0
    %375 = vmatpush1.msra.mxu0 %v328
    %376 = vmatprep.subr.mxu0 0.0
    %377 = vmatpush2.msra.mxu0 0.0
    %378 = vmatprep.subr.mxu0 0.0
    %379 = vmatpush2.msra.mxu0 0.0
    %380 = vmatprep.subr.mxu0 0.0
    %381 = vmatpush2.msra.mxu0 0.0
    %382 = vmatprep.subr.mxu0 0.0
    %383 = vmatpush2.msra.mxu0 0.0
    %384 = vmatprep.subr.mxu0 0.0
    %385 = vmatpush2.msra.mxu0 0.0
    %386 = vmatprep.subr.mxu0 0.0
    %387 = vmatpush2.msra.mxu0 0.0
    %388 = vmatprep.subr.mxu0 0.0
    %389 = vmatpush2.msra.mxu0 0.0
    %390 = vmatprep.subr.mxu0 0.0
    %391 = vmatpush2.msra.mxu0 0.0
    %392 = vmatprep.subr.mxu0 0.0
    %393 = vmatpush2.msra.mxu0 0.0
    %394 = vmatprep.subr.mxu0 0.0
    %395 = vmatpush2.msra.mxu0 0.0
    %396 = vmatprep.subr.mxu0 0.0
    %397 = vmatpush2.msra.mxu0 0.0
    %398 = vmatprep.subr.mxu0 0.0
    %399 = vmatpush2.msra.mxu0 0.0
    %400 = vmatprep.subr.mxu0 0.0
    %401 = vmatpush2.msra.mxu0 0.0
    %402 = vmatprep.subr.mxu0 0.0
    %403 = vmatpush2.msra.mxu0 0.0
    %404 = vmatprep.subr.mxu0 0.0
    %405 = vmatpush2.msra.mxu0 0.0
    %406 = vmatprep.subr.mxu0 0.0
    %407 = vmatpush2.msra.mxu0 0.0
    %408 = vmatprep.mubr.f32.mxu0 0.0
    %409 = vmatmul.mubr.f32.gmra.mxu0 %v306
    %v410 = vpop.f32.mrf.mxu0
    %v411 = vadd.f32 0.0, %v410
    %v412 = vpop.f32.mrf.mxu0
    %413 = vdwg.mxu0
    %414 = vmatprep.subr.mxu0 0.0
    %415 = vmatpush1.msra.mxu0 %v326
    %416 = vmatprep.subr.mxu0 0.0
    %417 = vmatpush1.msra.mxu0 %v325
    %418 = vmatprep.subr.mxu0 0.0
    %419 = vmatpush1.msra.mxu0 %v324
    %420 = vmatprep.subr.mxu0 0.0
    %421 = vmatpush1.msra.mxu0 %v323
    %422 = vmatprep.subr.mxu0 0.0
    %423 = vmatpush1.msra.mxu0 %v322
    %424 = vmatprep.subr.mxu0 0.0
    %425 = vmatpush1.msra.mxu0 %v321
    %426 = vmatprep.subr.mxu0 0.0
    %427 = vmatpush1.msra.mxu0 %v320
    %428 = vmatprep.subr.mxu0 0.0
    %429 = vmatpush1.msra.mxu0 %v319
    %430 = vmatprep.subr.mxu0 0.0
    %431 = vmatpush1.msra.mxu0 %v318
    %432 = vmatprep.subr.mxu0 0.0
    %433 = vmatpush1.msra.mxu0 %v317
    %434 = vmatprep.subr.mxu0 0.0
    %435 = vmatpush1.msra.mxu0 %v316
    %436 = vmatprep.subr.mxu0 0.0
    %437 = vmatpush1.msra.mxu0 %v315
    %438 = vmatprep.subr.mxu0 0.0
    %439 = vmatpush1.msra.mxu0 %v314
    %440 = vmatprep.subr.mxu0 0.0
    %441 = vmatpush1.msra.mxu0 %v313
    %442 = vmatprep.subr.mxu0 0.0
    %443 = vmatpush1.msra.mxu0 %v312
    %444 = vmatprep.subr.mxu0 0.0
    %445 = vmatpush1.msra.mxu0 %v311
    %446 = vmatprep.subr.mxu0 0.0
    %447 = vmatpush2.msra.mxu0 0.0
    %448 = vmatprep.subr.mxu0 0.0
    %449 = vmatpush2.msra.mxu0 0.0
    %450 = vmatprep.subr.mxu0 0.0
    %451 = vmatpush2.msra.mxu0 0.0
    %452 = vmatprep.subr.mxu0 0.0
    %453 = vmatpush2.msra.mxu0 0.0
    %454 = vmatprep.subr.mxu0 0.0
    %455 = vmatpush2.msra.mxu0 0.0
    %456 = vmatprep.subr.mxu0 0.0
    %457 = vmatpush2.msra.mxu0 0.0
    %458 = vmatprep.subr.mxu0 0.0
    %459 = vmatpush2.msra.mxu0 0.0
    %460 = vmatprep.subr.mxu0 0.0
    %461 = vmatpush2.msra.mxu0 0.0
    %462 = vmatprep.subr.mxu0 0.0
    %463 = vmatpush2.msra.mxu0 0.0
    %464 = vmatprep.subr.mxu0 0.0
    %465 = vmatpush2.msra.mxu0 0.0
    %466 = vmatprep.subr.mxu0 0.0
    %467 = vmatpush2.msra.mxu0 0.0
    %468 = vmatprep.subr.mxu0 0.0
    %469 = vmatpush2.msra.mxu0 0.0
    %470 = vmatprep.subr.mxu0 0.0
    %471 = vmatpush2.msra.mxu0 0.0
    %472 = vmatprep.subr.mxu0 0.0
    %473 = vmatpush2.msra.mxu0 0.0
    %474 = vmatprep.subr.mxu0 0.0
    %475 = vmatpush2.msra.mxu0 0.0
    %476 = vmatprep.subr.mxu0 0.0
    %477 = vmatpush2.msra.mxu0 0.0
    %478 = vmatprep.mubr.f32.mxu0 0.0
    %479 = vmatmul.mubr.f32.gmra.mxu0 %v309
    %v480 = vpop.f32.mrf.mxu0
    %v481 = vadd.f32 %v411, %v480
    %v482 = vpop.f32.mrf.mxu0
    %483 = vdwg.mxu0
    %v484 = vld [vmem:[%s3 + $0x3] sm:$0x1]
    %v485 = vlaneseq
    %v486 = vshrl.u32 %v485, 7
    %v487 = vsub.s32 0, %v486
    %v488 = vrot.slane %v484, %v487
    %v489 = vadd.f32 %v481, %v488
    %v490 = vmax.f32 %v489, 0.0
    %s491 = scalar_lea.vmem [#allocation2], 640
    %v492 = vld [vmem:[%s491] sm:$0xff]
    %v493 = vld [vmem:[%s491 + $0x8] sm:$0xff]
    %v494 = vld [vmem:[%s491 + $0x10] sm:$0xff]
    %v495 = vld [vmem:[%s491 + $0x18] sm:$0xff]
    %v496 = vld [vmem:[%s491 + $0x20] sm:$0xff]
    %v497 = vld [vmem:[%s491 + $0x28] sm:$0xff]
    %v498 = vld [vmem:[%s491 + $0x30] sm:$0xff]
    %v499 = vld [vmem:[%s491 + $0x38] sm:$0xff]
    %v500 = vld [vmem:[%s491 + $0x40] sm:$0xff]
    %v501 = vld [vmem:[%s491 + $0x48] sm:$0xff]
    %v502 = vld [vmem:[%s491 + $0x50] sm:$0xff]
    %v503 = vld [vmem:[%s491 + $0x58] sm:$0xff]
    %v504 = vld [vmem:[%s491 + $0x60] sm:$0xff]
    %v505 = vld [vmem:[%s491 + $0x68] sm:$0xff]
    %v506 = vld [vmem:[%s491 + $0x70] sm:$0xff]
    %v507 = vld [vmem:[%s491 + $0x78] sm:$0xff]
    %v508 = vld [vmem:[%s3 + $0x4] sm:$0x1]
    %v509 = vlaneseq
    %v510 = vshrl.u32 %v509, 7
    %v511 = vsub.s32 0, %v510
    %v512 = vrot.slane %v508, %v511
    %513 = vmatprep.subr.mxu0 0.0
    %514 = vmatpush1.msra.mxu0 %v507
    %515 = vmatprep.subr.mxu0 0.0
    %516 = vmatpush1.msra.mxu0 %v506
    %517 = vmatprep.subr.mxu0 0.0
    %518 = vmatpush1.msra.mxu0 %v505
    %519 = vmatprep.subr.mxu0 0.0
    %520 = vmatpush1.msra.mxu0 %v504
    %521 = vmatprep.subr.mxu0 0.0
    %522 = vmatpush1.msra.mxu0 %v503
    %523 = vmatprep.subr.mxu0 0.0
    %524 = vmatpush1.msra.mxu0 %v502
    %525 = vmatprep.subr.mxu0 0.0
    %526 = vmatpush1.msra.mxu0 %v501
    %527 = vmatprep.subr.mxu0 0.0
    %528 = vmatpush1.msra.mxu0 %v500
    %529 = vmatprep.subr.mxu0 0.0
    %530 = vmatpush1.msra.mxu0 %v499
    %531 = vmatprep.subr.mxu0 0.0
    %532 = vmatpush1.msra.mxu0 %v498
    %533 = vmatprep.subr.mxu0 0.0
    %534 = vmatpush1.msra.mxu0 %v497
    %535 = vmatprep.subr.mxu0 0.0
    %536 = vmatpush1.msra.mxu0 %v496
    %537 = vmatprep.subr.mxu0 0.0
    %538 = vmatpush1.msra.mxu0 %v495
    %539 = vmatprep.subr.mxu0 0.0
    %540 = vmatpush1.msra.mxu0 %v494
    %541 = vmatprep.subr.mxu0 0.0
    %542 = vmatpush1.msra.mxu0 %v493
    %543 = vmatprep.subr.mxu0 0.0
    %544 = vmatpush1.msra.mxu0 %v492
    %545 = vmatprep.subr.mxu0 0.0
    %546 = vmatpush2.msra.mxu0 0.0
    %547 = vmatprep.subr.mxu0 0.0
    %548 = vmatpush2.msra.mxu0 0.0
    %549 = vmatprep.subr.mxu0 0.0
    %550 = vmatpush2.msra.mxu0 0.0
    %551 = vmatprep.subr.mxu0 0.0
    %552 = vmatpush2.msra.mxu0 0.0
    %553 = vmatprep.subr.mxu0 0.0
    %554 = vmatpush2.msra.mxu0 0.0
    %555 = vmatprep.subr.mxu0 0.0
    %556 = vmatpush2.msra.mxu0 0.0
    %557 = vmatprep.subr.mxu0 0.0
    %558 = vmatpush2.msra.mxu0 0.0
    %559 = vmatprep.subr.mxu0 0.0
    %560 = vmatpush2.msra.mxu0 0.0
    %561 = vmatprep.subr.mxu0 0.0
    %562 = vmatpush2.msra.mxu0 0.0
    %563 = vmatprep.subr.mxu0 0.0
    %564 = vmatpush2.msra.mxu0 0.0
    %565 = vmatprep.subr.mxu0 0.0
    %566 = vmatpush2.msra.mxu0 0.0
    %567 = vmatprep.subr.mxu0 0.0
    %568 = vmatpush2.msra.mxu0 0.0
    %569 = vmatprep.subr.mxu0 0.0
    %570 = vmatpush2.msra.mxu0 0.0
    %571 = vmatprep.subr.mxu0 0.0
    %572 = vmatpush2.msra.mxu0 0.0
    %573 = vmatprep.subr.mxu0 0.0
    %574 = vmatpush2.msra.mxu0 0.0
    %575 = vmatprep.subr.mxu0 0.0
    %576 = vmatpush2.msra.mxu0 0.0
    %577 = vmatprep.mubr.f32.mxu0 0.0
    %578 = vmatmul.mubr.f32.gmra.mxu0 %v490
    %v579 = vpop.f32.mrf.mxu0
    %v580 = vadd.f32 %v512, %v579
    %v581 = vpop.f32.mrf.mxu0
    %582 = vdwg.mxu0
    %v583 = vmax.f32 %v580, 0.0
    %s584 = scalar_lea.vmem [#allocation2], 768
    %v585 = vld [vmem:[%s584] sm:$0xff]
    %v586 = vld [vmem:[%s584 + $0x8] sm:$0xff]
    %v587 = vld [vmem:[%s584 + $0x10] sm:$0xff]
    %v588 = vld [vmem:[%s584 + $0x18] sm:$0xff]
    %v589 = vld [vmem:[%s584 + $0x20] sm:$0xff]
    %v590 = vld [vmem:[%s584 + $0x28] sm:$0xff]
    %v591 = vld [vmem:[%s584 + $0x30] sm:$0xff]
    %v592 = vld [vmem:[%s584 + $0x38] sm:$0xff]
    %v593 = vld [vmem:[%s584 + $0x40] sm:$0xff]
    %v594 = vld [vmem:[%s584 + $0x48] sm:$0xff]
    %v595 = vld [vmem:[%s584 + $0x50] sm:$0xff]
    %v596 = vld [vmem:[%s584 + $0x58] sm:$0xff]
    %v597 = vld [vmem:[%s584 + $0x60] sm:$0xff]
    %v598 = vld [vmem:[%s584 + $0x68] sm:$0xff]
    %v599 = vld [vmem:[%s584 + $0x70] sm:$0xff]
    %v600 = vld [vmem:[%s584 + $0x78] sm:$0xff]
    %v601 = vld [vmem:[%s3 + $0x5] sm:$0x1]
    %v602 = vlaneseq
    %v603 = vshrl.u32 %v602, 7
    %v604 = vsub.s32 0, %v603
    %v605 = vrot.slane %v601, %v604
    %606 = vmatprep.subr.mxu0 0.0
    %607 = vmatpush1.msra.mxu0 %v600
    %608 = vmatprep.subr.mxu0 0.0
    %609 = vmatpush1.msra.mxu0 %v599
    %610 = vmatprep.subr.mxu0 0.0
    %611 = vmatpush1.msra.mxu0 %v598
    %612 = vmatprep.subr.mxu0 0.0
    %613 = vmatpush1.msra.mxu0 %v597
    %614 = vmatprep.subr.mxu0 0.0
    %615 = vmatpush1.msra.mxu0 %v596
    %616 = vmatprep.subr.mxu0 0.0
    %617 = vmatpush1.msra.mxu0 %v595
    %618 = vmatprep.subr.mxu0 0.0
    %619 = vmatpush1.msra.mxu0 %v594
    %620 = vmatprep.subr.mxu0 0.0
    %621 = vmatpush1.msra.mxu0 %v593
    %622 = vmatprep.subr.mxu0 0.0
    %623 = vmatpush1.msra.mxu0 %v592
    %624 = vmatprep.subr.mxu0 0.0
    %625 = vmatpush1.msra.mxu0 %v591
    %626 = vmatprep.subr.mxu0 0.0
    %627 = vmatpush1.msra.mxu0 %v590
    %628 = vmatprep.subr.mxu0 0.0
    %629 = vmatpush1.msra.mxu0 %v589
    %630 = vmatprep.subr.mxu0 0.0
    %631 = vmatpush1.msra.mxu0 %v588
    %632 = vmatprep.subr.mxu0 0.0
    %633 = vmatpush1.msra.mxu0 %v587
    %634 = vmatprep.subr.mxu0 0.0
    %635 = vmatpush1.msra.mxu0 %v586
    %636 = vmatprep.subr.mxu0 0.0
    %637 = vmatpush1.msra.mxu0 %v585
    %638 = vmatprep.subr.mxu0 0.0
    %639 = vmatpush2.msra.mxu0 0.0
    %640 = vmatprep.subr.mxu0 0.0
    %641 = vmatpush2.msra.mxu0 0.0
    %642 = vmatprep.subr.mxu0 0.0
    %643 = vmatpush2.msra.mxu0 0.0
    %644 = vmatprep.subr.mxu0 0.0
    %645 = vmatpush2.msra.mxu0 0.0
    %646 = vmatprep.subr.mxu0 0.0
    %647 = vmatpush2.msra.mxu0 0.0
    %648 = vmatprep.subr.mxu0 0.0
    %649 = vmatpush2.msra.mxu0 0.0
    %650 = vmatprep.subr.mxu0 0.0
    %651 = vmatpush2.msra.mxu0 0.0
    %652 = vmatprep.subr.mxu0 0.0
    %653 = vmatpush2.msra.mxu0 0.0
    %654 = vmatprep.subr.mxu0 0.0
    %655 = vmatpush2.msra.mxu0 0.0
    %656 = vmatprep.subr.mxu0 0.0
    %657 = vmatpush2.msra.mxu0 0.0
    %658 = vmatprep.subr.mxu0 0.0
    %659 = vmatpush2.msra.mxu0 0.0
    %660 = vmatprep.subr.mxu0 0.0
    %661 = vmatpush2.msra.mxu0 0.0
    %662 = vmatprep.subr.mxu0 0.0
    %663 = vmatpush2.msra.mxu0 0.0
    %664 = vmatprep.subr.mxu0 0.0
    %665 = vmatpush2.msra.mxu0 0.0
    %666 = vmatprep.subr.mxu0 0.0
    %667 = vmatpush2.msra.mxu0 0.0
    %668 = vmatprep.subr.mxu0 0.0
    %669 = vmatpush2.msra.mxu0 0.0
    %670 = vmatprep.mubr.f32.mxu0 0.0
    %671 = vmatmul.mubr.f32.gmra.mxu0 %v583
    %v672 = vpop.f32.mrf.mxu0
    %v673 = vadd.f32 %v605, %v672
    %v674 = vpop.f32.mrf.mxu0
    %675 = vdwg.mxu0
    %676 = vst [vmem:[%s4] sm:$0xff] %v673
    // Predicated region
    $region22: #{contact_vae_encoder.1} parent=1 // pred_check
      _
    $region23: #{contact_vae_encoder.1} parent=1 // pred_check_branch
      %678 = sbr.rel (0) target = $region25
    $region24: #{contact_vae_encoder.1} parent=1 // pred_region
      _
    $region25: #{contact_vae_encoder.1} parent=1 // pred_fallthru
      _
    // Predicated region
    $region26: #{contact_vae_encoder.1} parent=1 // pred_check
      _
    $region27: #{contact_vae_encoder.1} parent=1 // pred_check_branch
      %680 = sbr.rel (0) target = $region29
    $region28: #{contact_vae_encoder.1} parent=1 // pred_region
      _
    $region29: #{contact_vae_encoder.1} parent=1 // pred_fallthru
      _
    %681 = vsyncpa [#allocation3], 1

</llo_original>
